<compile_context>
chip_gen: v5e
topology: v5e:2x2
jax: 0.10.0
libtpu: 0.0.40
codegen_flags: <defaults>
</compile_context>

<pallas_src>
import jax
import jax.numpy as jnp
from jax.experimental import pallas as pl
from jax.experimental.pallas import tpu as pltpu


def _spatial_gate_kernel(x_ref, mask_ref, o_ref):
    # x_ref:    (B, C, HWp)  features for B batch items (native dtype)
    # mask_ref: (B, 1, HWp)  binary spatial mask as float (0 in padded lanes)
    # o_ref:    (B, 3, HWp)  [max, mean, min] pooled, masked-normalized
    x = x_ref[...]                            # keep native dtype (no fp32 copy of the full tile)
    m = mask_ref[...].astype(jnp.float32)     # (B, 1, HWp)
    c = x.shape[1]

    # --- ChannelPool: max / mean / min over the channel axis ---
    pooled = jnp.concatenate(
        [
            jnp.max(x, axis=1, keepdims=True).astype(jnp.float32),
            jnp.sum(x, axis=1, keepdims=True, dtype=jnp.float32) * (1.0 / c),
            jnp.min(x, axis=1, keepdims=True).astype(jnp.float32),
        ],
        axis=1,
    )                                                              # (B, 3, HWp) fp32

    # --- masked ChannelNorm (per pooled channel, unbiased std, ddof=1) ---
    n1 = jnp.sum(m, axis=2, keepdims=True)                         # (B, 1, 1) count of mask==1
    mean = jnp.sum(pooled * m, axis=2, keepdims=True) / n1         # (B, 3, 1)
    dev = (pooled - mean) * m                                      # zero outside mask / in padding
    var = jnp.sum(dev * dev, axis=2, keepdims=True) / (n1 - 1.0)   # (B, 3, 1)
    inv_std = jax.lax.rsqrt(var)                                   # EUP op (free slot)

    # (pooled - mean)/std at mask==1, exactly 0 at mask==0 (dev is pre-masked)
    o_ref[...] = (dev * inv_std).astype(o_ref.dtype)


def _largest_divisor_at_most(n, cap):
    for d in range(min(n, cap), 0, -1):
        if n % d == 0:
            return d
    return 1


def spatial_gate_forward(x, mask, *, max_batch_tile=8,
                         vmem_limit_bytes=48 * 1024 * 1024):
    """SpatialGate forward.  x: (N, C, H, W); mask: (N, H, W) of {0,1}.

    Returns (N, 3, H, W)."""
    n, c, h, w = x.shape
    hw = h * w
    # Lane-dense, 128-aligned spatial axis (full-lane DMAs and unmasked stores).
    hw_pad = ((hw + 127) // 128) * 128

    x_flat = x.reshape(n, c, hw)
    mask_flat = mask.astype(x.dtype).reshape(n, 1, hw)
    if hw_pad != hw:
        pad = hw_pad - hw
        x_flat = jnp.pad(x_flat, ((0, 0), (0, 0), (0, pad)))
        mask_flat = jnp.pad(mask_flat, ((0, 0), (0, 0), (0, pad)))  # padded lanes: mask == 0

    # Pick the batch tile: amortize per-grid-step overhead while keeping the
    # double-buffered working set comfortably inside the VMEM budget.
    itemsize = jnp.dtype(x.dtype).itemsize
    per_item_bytes = (c + 1 + 3) * hw_pad * itemsize
    budget = vmem_limit_bytes // 3            # headroom for double buffering
    b_cap = max(1, min(max_batch_tile, budget // max(per_item_bytes, 1)))
    b_tile = _largest_divisor_at_most(n, b_cap)

    # TODO(synk): for very large C*HW (where even a single (1, C, HW) tile blows
    # the VMEM budget, esp. on v7x's 64 MiB), add a C-reduction grid axis marked
    # "arbitrary" with a (3, HW) running max/sum/min VMEM scratch and finalize
    # (masked mean/var + store) on the last C step.
    out = pl.pallas_call(
        _spatial_gate_kernel,
        out_shape=jax.ShapeDtypeStruct((n, 3, hw_pad), x.dtype),
        grid_spec=pltpu.PrefetchScalarGridSpec(
            num_scalar_prefetch=0,
            grid=(n // b_tile,),
            in_specs=[
                pl.BlockSpec((b_tile, c, hw_pad), lambda i: (i, 0, 0)),
                pl.BlockSpec((b_tile, 1, hw_pad), lambda i: (i, 0, 0)),
            ],
            out_specs=pl.BlockSpec((b_tile, 3, hw_pad), lambda i: (i, 0, 0)),
        ),
        compiler_params=pltpu.CompilerParams(
            dimension_semantics=("parallel",),
            vmem_limit_bytes=vmem_limit_bytes,
        ),
    )(x_flat, mask_flat)

    if hw_pad != hw:
        out = out[:, :, :hw]
    return out.reshape(n, 3, h, w)


def _reference(x, mask):
    """Pure-JAX reference matching the PyTorch module semantics."""
    pooled = jnp.stack(
        [jnp.max(x, axis=1), jnp.mean(x, axis=1), jnp.min(x, axis=1)], axis=1)   # (N,3,H,W)
    sel = (mask == 1)[:, None, :, :]                                             # (N,1,H,W)
    n1 = jnp.sum(sel, axis=(2, 3), keepdims=True).astype(x.dtype)                # (N,1,1,1)
    mean = jnp.sum(jnp.where(sel, pooled, 0.0), axis=(2, 3), keepdims=True) / n1
    dev = jnp.where(sel, pooled - mean, 0.0)
    var = jnp.sum(dev * dev, axis=(2, 3), keepdims=True) / (n1 - 1.0)            # ddof=1
    out = (pooled - mean) / jnp.sqrt(var)
    return jnp.where(sel, out, 0.0)


if __name__ == "__main__":
    N, C, H, W = 2, 4, 16, 16

    key = jax.random.PRNGKey(0)
    kx, km = jax.random.split(key, 2)

    x = jax.random.normal(kx, (N, C, H, W), dtype=jnp.float32)
    # Binary spatial mask with plenty of "1" positions per batch item.
    mask = (jax.random.uniform(km, (N, H, W)) > 0.3).astype(jnp.float32)

    out = spatial_gate_forward(x, mask)
    out = jax.block_until_ready(out)

    ref = _reference(x, mask)
    assert out.shape == (N, 3, H, W), out.shape
    max_err = float(jnp.max(jnp.abs(out - ref)))
    assert jnp.allclose(out, ref, atol=1e-4, rtol=1e-4), max_err

    print("KERNEL_OK")
</pallas_src>

<mosaic_0001>
module attributes {stable_mosaic.version = 11 : i64} {
  func.func @_spatial_gate_kernel(%arg0: i32, %arg1: memref<2x4x256xf32, #tpu.memory_space<vmem>>, %arg2: memref<2x1x256xf32, #tpu.memory_space<vmem>>, %arg3: memref<2x3x256xf32, #tpu.memory_space<vmem>>) attributes {dimension_semantics = [#tpu.dimension_semantics<parallel>], iteration_bounds = array<i64: 1>, scalar_prefetch = 0 : i64, scratch_operands = 0 : i64, tpu.core_type = #tpu.core_type<tc>, window_params = [{transform_indices = @transform_0, window_bounds = array<i64: 2, 4, 256>}, {transform_indices = @transform_1, window_bounds = array<i64: 2, 1, 256>}, {transform_indices = @transform_2, window_bounds = array<i64: 2, 3, 256>}]} {
    %c0 = arith.constant 0 : index
    %c0_0 = arith.constant 0 : index
    %c0_1 = arith.constant 0 : index
    %0 = vector.load %arg1[%c0, %c0_0, %c0_1] : memref<2x4x256xf32, #tpu.memory_space<vmem>>, vector<2x4x256xf32>
    %c0_2 = arith.constant 0 : index
    %c0_3 = arith.constant 0 : index
    %c0_4 = arith.constant 0 : index
    %1 = vector.load %arg2[%c0_2, %c0_3, %c0_4] : memref<2x1x256xf32, #tpu.memory_space<vmem>>, vector<2x1x256xf32>
    %cst = arith.constant dense<0xFF800000> : vector<2x256xf32>
    %2 = vector.multi_reduction <maximumf>, %0, %cst [1] : vector<2x4x256xf32> to vector<2x256xf32>
    %3 = vector.shape_cast %2 : vector<2x256xf32> to vector<2x1x256xf32>
    %cst_5 = arith.constant dense<0.000000e+00> : vector<2x256xf32>
    %4 = vector.multi_reduction <add>, %0, %cst_5 [1] : vector<2x4x256xf32> to vector<2x256xf32>
    %5 = vector.shape_cast %4 : vector<2x256xf32> to vector<2x1x256xf32>
    %cst_6 = arith.constant 2.500000e-01 : f32
    %6 = vector.broadcast %cst_6 : f32 to vector<2x1x256xf32>
    %7 = arith.mulf %5, %6 : vector<2x1x256xf32>
    %cst_7 = arith.constant dense<0x7F800000> : vector<2x256xf32>
    %8 = vector.multi_reduction <minimumf>, %0, %cst_7 [1] : vector<2x4x256xf32> to vector<2x256xf32>
    %9 = vector.shape_cast %8 : vector<2x256xf32> to vector<2x1x256xf32>
    %10 = tpu.concatenate %3, %7, %9 in 1 : vector<2x1x256xf32>, vector<2x1x256xf32>, vector<2x1x256xf32> -> vector<2x3x256xf32>
    %cst_8 = arith.constant dense<0.000000e+00> : vector<2x1xf32>
    %11 = vector.multi_reduction <add>, %1, %cst_8 [2] : vector<2x1x256xf32> to vector<2x1xf32>
    %12 = vector.shape_cast %11 : vector<2x1xf32> to vector<2x1x1xf32>
    %13 = vector.broadcast %1 : vector<2x1x256xf32> to vector<2x3x256xf32>
    %14 = arith.mulf %10, %13 : vector<2x3x256xf32>
    %cst_9 = arith.constant dense<0.000000e+00> : vector<2x3xf32>
    %15 = vector.multi_reduction <add>, %14, %cst_9 [2] : vector<2x3x256xf32> to vector<2x3xf32>
    %16 = vector.shape_cast %15 : vector<2x3xf32> to vector<2x3x1xf32>
    %17 = vector.broadcast %12 : vector<2x1x1xf32> to vector<2x3x1xf32>
    %18 = arith.divf %16, %17 : vector<2x3x1xf32>
    %19 = vector.broadcast %18 : vector<2x3x1xf32> to vector<2x3x256xf32>
    %20 = arith.subf %10, %19 : vector<2x3x256xf32>
    %21 = vector.broadcast %1 : vector<2x1x256xf32> to vector<2x3x256xf32>
    %22 = arith.mulf %20, %21 : vector<2x3x256xf32>
    %23 = arith.mulf %22, %22 : vector<2x3x256xf32>
    %cst_10 = arith.constant dense<0.000000e+00> : vector<2x3xf32>
    %24 = vector.multi_reduction <add>, %23, %cst_10 [2] : vector<2x3x256xf32> to vector<2x3xf32>
    %25 = vector.shape_cast %24 : vector<2x3xf32> to vector<2x3x1xf32>
    %cst_11 = arith.constant 1.000000e+00 : f32
    %26 = vector.broadcast %cst_11 : f32 to vector<2x1x1xf32>
    %27 = arith.subf %12, %26 : vector<2x1x1xf32>
    %28 = vector.broadcast %27 : vector<2x1x1xf32> to vector<2x3x1xf32>
    %29 = arith.divf %25, %28 : vector<2x3x1xf32>
    %30 = math.rsqrt %29 : vector<2x3x1xf32>
    %31 = vector.broadcast %30 : vector<2x3x1xf32> to vector<2x3x256xf32>
    %32 = arith.mulf %22, %31 : vector<2x3x256xf32>
    %c0_12 = arith.constant 0 : index
    %c0_13 = arith.constant 0 : index
    %c0_14 = arith.constant 0 : index
    %33 = vector.load %arg3[%c0_12, %c0_13, %c0_14] : memref<2x3x256xf32, #tpu.memory_space<vmem>>, vector<2x3x256xf32>
    tpu.vector_store %arg3[%c0_12, %c0_13, %c0_14], %32 {strides = array<i32>} : memref<2x3x256xf32, #tpu.memory_space<vmem>>, vector<2x3x256xf32>,
    return
  }
  func.func @transform_0(%arg0: i32) -> (i32, i32, i32) {
    %c0_i32 = arith.constant 0 : i32
    %c0_i32_0 = arith.constant 0 : i32
    %c0_i32_1 = arith.constant 0 : i32
    return %arg0, %c0_i32, %c0_i32_0 : i32, i32, i32
  }
  func.func @transform_1(%arg0: i32) -> (i32, i32, i32) {
    %c0_i32 = arith.constant 0 : i32
    %c0_i32_0 = arith.constant 0 : i32
    %c0_i32_1 = arith.constant 0 : i32
    return %arg0, %c0_i32, %c0_i32_0 : i32, i32, i32
  }
  func.func @transform_2(%arg0: i32) -> (i32, i32, i32) {
    %c0_i32 = arith.constant 0 : i32
    %c0_i32_0 = arith.constant 0 : i32
    %c0_i32_1 = arith.constant 0 : i32
    return %arg0, %c0_i32, %c0_i32_0 : i32, i32, i32
  }
}

</mosaic_0001>

<llo_original>
// kernel: tpu_custom_call.1
$region0: #{tpu_custom_call.1}
  #allocation0 [shape = 'u32[]', space=smem, size = 0x4, offset = 0x4, fixed_abs, tag = 'smem constant byte address 0x4 - core index']
  #allocation1 [shape = 'u32[72,128]{1,0:T(1,128)}', space=vmem, size = 0x9000, scoped, tag = 'internal scratch']
  %s0 = inlined_call_operand.hbm [shape: f32[2,4,256], index: 0, kind: input, shape index: {}]
  %s1 = inlined_call_operand.hbm [shape: f32[2,1,256], index: 1, kind: input, shape index: {}]
  %s2 = inlined_call_operand.vmem [shape: f32[2,3,256], index: 2, kind: output, shape index: {}]
  %s3 = sld [smem:[#allocation0]]
  $region26: #{tpu_custom_call.1} parent=0
    _
  %s5 = ssub.s32 1, %s3
  %s6 = scalar_select 0, %s5, %s3
  $region1: #{tpu_custom_call.1} parent=0
    #allocation2 [shape = 'u8[8192]{0}', space=vmem, size = 0x2000, scoped, tag = 'input window, operand 0, single buffered']
    #allocation3 [shape = 's32[1]{0}', space=sflag, size = 0x4, scoped, tag = 'scoped memory for tpu_custom_call.1']
    #allocation4 [shape = 'u8[2048]{0}', space=vmem, size = 0x800, scoped, tag = 'input window, operand 1, single buffered']
    #allocation5 [shape = 's32[1]{0}', space=sflag, size = 0x4, scoped, tag = 'scoped memory for tpu_custom_call.1']
    %7 = vsyncpa [#allocation3], 0
    %8 = vsyncpa [#allocation5], 0
    // Predicated region
    $region2: #{tpu_custom_call.1} parent=1 // pred_check
      _
    $region3: #{tpu_custom_call.1} parent=1 // pred_check_branch
      %10 = sbr.rel (0) target = $region5
    $region4: #{tpu_custom_call.1} parent=1 // pred_region
      %12 = vsyncadd [#allocation3], 0
      %s13 = sshll.u32 %s0, 4
      %s14 = int_to_ptr.hbm [resolvable:$true] %s13
      %s15 = sshll.u32 [#allocation2], 4
      %s16 = int_to_ptr.vmem [resolvable:$true] %s15
      %21 = dma.hbm_to_vmem [thread:$0]  %s14, 256, %s16, [#allocation3], 128, 128, 8
    $region5: #{tpu_custom_call.1} parent=1 // pred_fallthru
      _
    // Predicated region
    $region6: #{tpu_custom_call.1} parent=1 // pred_check
      _
    $region7: #{tpu_custom_call.1} parent=1 // pred_check_branch
      %23 = sbr.rel (0) target = $region9
    $region8: #{tpu_custom_call.1} parent=1 // pred_region
      %25 = vsyncadd [#allocation5], 0
      %s26 = sshll.u32 %s1, 4
      %s27 = int_to_ptr.hbm [resolvable:$true] %s26
      %s28 = sshll.u32 [#allocation4], 4
      %s29 = int_to_ptr.vmem [resolvable:$true] %s28
      %34 = dma.hbm_to_vmem [thread:$0]  %s27, 64, %s29, [#allocation5], 32, 32, 2
    $region9: #{tpu_custom_call.1} parent=1 // pred_fallthru
      _
    // Predicated region
    $region10: #{tpu_custom_call.1} parent=1 // pred_check
      _
    $region11: #{tpu_custom_call.1} parent=1 // pred_check_branch
      %36 = sbr.rel (0) target = $region13
    $region12: #{tpu_custom_call.1} parent=1 // pred_region
      %38 = dma.done [#allocation3], 256
    $region13: #{tpu_custom_call.1} parent=1 // pred_fallthru
      _
    // Predicated region
    $region14: #{tpu_custom_call.1} parent=1 // pred_check
      _
    $region15: #{tpu_custom_call.1} parent=1 // pred_check_branch
      %40 = sbr.rel (0) target = $region17
    $region16: #{tpu_custom_call.1} parent=1 // pred_region
      %42 = dma.done [#allocation5], 64
    $region17: #{tpu_custom_call.1} parent=1 // pred_fallthru
      _
    %v43 = vld [vmem:[#allocation2] sm:$0xff]
    %v44 = vld [vmem:[#allocation2 + $0x8] sm:$0xff]
    %v45 = vld [vmem:[#allocation4] sm:$0x3]
    %v46 = vld [vmem:[#allocation4 + $0x2] sm:$0x3]
    %49 = vst [vmem:[#allocation1] ss:$2 sm:$0xff] %v43
    %v50 = vld.sshfl [vmem:[#allocation1] sm:$0xff pattern:$0x75316420]
    %v51 = vld.sshfl [vmem:[#allocation1 + $0x8] sm:$0xff pattern:$0x75316420]
    %s52 = scalar_lea.vmem [#allocation1], 16
    %53 = vst [vmem:[%s52] ss:$2 sm:$0xff] %v44
    %v54 = vld.sshfl [vmem:[#allocation1 + $0x10] sm:$0xff pattern:$0x75316420]
    %v55 = vld.sshfl [vmem:[#allocation1 + $0x18] sm:$0xff pattern:$0x75316420]
    %vm60 = vcmask 1043456
    %v61 = vsel %vm60, %v50, -inf
    %v62 = vrot.slane %v61, 4
    %v63 = vmax.f32 %v61, %v62
    %v64 = vrot.slane %v63, 2
    %v65 = vmax.f32 %v63, %v64
    %v66 = vrot.slane %v65, 1
    %v67 = vmax.f32 %v65, %v66
    %v68 = vsel %vm60, %v51, -inf
    %v69 = vrot.slane %v68, 4
    %v70 = vmax.f32 %v68, %v69
    %v71 = vrot.slane %v70, 2
    %v72 = vmax.f32 %v70, %v71
    %v73 = vrot.slane %v72, 1
    %v74 = vmax.f32 %v72, %v73
    %v75 = vsel %vm60, %v54, -inf
    %v76 = vrot.slane %v75, 4
    %v77 = vmax.f32 %v75, %v76
    %v78 = vrot.slane %v77, 2
    %v79 = vmax.f32 %v77, %v78
    %v80 = vrot.slane %v79, 1
    %v81 = vmax.f32 %v79, %v80
    %v82 = vsel %vm60, %v55, -inf
    %v83 = vrot.slane %v82, 4
    %v84 = vmax.f32 %v82, %v83
    %v85 = vrot.slane %v84, 2
    %v86 = vmax.f32 %v84, %v85
    %v87 = vrot.slane %v86, 1
    %v88 = vmax.f32 %v86, %v87
    %89 = vst [vmem:[#allocation1] ss:$2 sm:$0xff] %v43
    %v90 = vld.sshfl [vmem:[#allocation1] sm:$0xff pattern:$0x75316420]
    %v91 = vld.sshfl [vmem:[#allocation1 + $0x8] sm:$0xff pattern:$0x75316420]
    %s92 = scalar_lea.vmem [#allocation1], 16
    %93 = vst [vmem:[%s92] ss:$2 sm:$0xff] %v44
    %v94 = vld.sshfl [vmem:[#allocation1 + $0x10] sm:$0xff pattern:$0x75316420]
    %v95 = vld.sshfl [vmem:[#allocation1 + $0x18] sm:$0xff pattern:$0x75316420]
    %v100 = vsel %vm60, %v90, 0.0
    %v101 = vrot.slane %v100, 4
    %v102 = vadd.f32 %v100, %v101
    %v103 = vrot.slane %v102, 2
    %v104 = vadd.f32 %v102, %v103
    %v105 = vrot.slane %v104, 1
    %v106 = vadd.f32 %v104, %v105
    %v107 = vsel %vm60, %v91, 0.0
    %v108 = vrot.slane %v107, 4
    %v109 = vadd.f32 %v107, %v108
    %v110 = vrot.slane %v109, 2
    %v111 = vadd.f32 %v109, %v110
    %v112 = vrot.slane %v111, 1
    %v113 = vadd.f32 %v111, %v112
    %v114 = vsel %vm60, %v94, 0.0
    %v115 = vrot.slane %v114, 4
    %v116 = vadd.f32 %v114, %v115
    %v117 = vrot.slane %v116, 2
    %v118 = vadd.f32 %v116, %v117
    %v119 = vrot.slane %v118, 1
    %v120 = vadd.f32 %v118, %v119
    %v121 = vsel %vm60, %v95, 0.0
    %v122 = vrot.slane %v121, 4
    %v123 = vadd.f32 %v121, %v122
    %v124 = vrot.slane %v123, 2
    %v125 = vadd.f32 %v123, %v124
    %v126 = vrot.slane %v125, 1
    %v127 = vadd.f32 %v125, %v126
    %v128 = vmul.f32 %v106, 0.25
    %v129 = vmul.f32 %v113, 0.25
    %v130 = vmul.f32 %v120, 0.25
    %v131 = vmul.f32 %v127, 0.25
    %132 = vst [vmem:[#allocation1] ss:$2 sm:$0xff] %v43
    %v133 = vld.sshfl [vmem:[#allocation1] sm:$0xff pattern:$0x75316420]
    %v134 = vld.sshfl [vmem:[#allocation1 + $0x8] sm:$0xff pattern:$0x75316420]
    %s135 = scalar_lea.vmem [#allocation1], 16
    %136 = vst [vmem:[%s135] ss:$2 sm:$0xff] %v44
    %v137 = vld.sshfl [vmem:[#allocation1 + $0x10] sm:$0xff pattern:$0x75316420]
    %v138 = vld.sshfl [vmem:[#allocation1 + $0x18] sm:$0xff pattern:$0x75316420]
    %v143 = vsel %vm60, %v133, inf
    %v144 = vrot.slane %v143, 4
    %v145 = vmin.f32 %v143, %v144
    %v146 = vrot.slane %v145, 2
    %v147 = vmin.f32 %v145, %v146
    %v148 = vrot.slane %v147, 1
    %v149 = vmin.f32 %v147, %v148
    %v150 = vsel %vm60, %v134, inf
    %v151 = vrot.slane %v150, 4
    %v152 = vmin.f32 %v150, %v151
    %v153 = vrot.slane %v152, 2
    %v154 = vmin.f32 %v152, %v153
    %v155 = vrot.slane %v154, 1
    %v156 = vmin.f32 %v154, %v155
    %v157 = vsel %vm60, %v137, inf
    %v158 = vrot.slane %v157, 4
    %v159 = vmin.f32 %v157, %v158
    %v160 = vrot.slane %v159, 2
    %v161 = vmin.f32 %v159, %v160
    %v162 = vrot.slane %v161, 1
    %v163 = vmin.f32 %v161, %v162
    %v164 = vsel %vm60, %v138, inf
    %v165 = vrot.slane %v164, 4
    %v166 = vmin.f32 %v164, %v165
    %v167 = vrot.slane %v166, 2
    %v168 = vmin.f32 %v166, %v167
    %v169 = vrot.slane %v168, 1
    %v170 = vmin.f32 %v168, %v169
    %vm171 = vcmask 1040384
    %v172 = vsel %vm171, %v67, %v128
    %v173 = vsel %vm171, %v74, %v129
    %v174 = vsel %vm171, %v81, %v130
    %v175 = vsel %vm171, %v88, %v131
    %vm176 = vcmask 1041408
    %v177 = vsel %vm176, %v172, %v149
    %v178 = vsel %vm176, %v173, %v156
    %v179 = vsel %vm176, %v174, %v163
    %v180 = vsel %vm176, %v175, %v170
    %v183 = vperm.slane %v45, 0
    %v184 = vperm.slane %v45, 1
    %v185 = vperm.slane %v46, 0
    %v186 = vperm.slane %v46, 1
    %v191 = vsel %vm171, %v183, 0.0
    %v192 = vsel %vm171, %v184, 0.0
    %v193 = vadd.f32 %v191, %v192
    %194 = vadd.xlane.f32.xlu0 %v193
    %v195 = vpop.xlane.xlu0 %194
    %v196 = vsel %vm171, %v185, 0.0
    %v197 = vsel %vm171, %v186, 0.0
    %v198 = vadd.f32 %v196, %v197
    %199 = vadd.xlane.f32.xlu0 %v198
    %v200 = vpop.xlane.xlu0 %199
    %v201 = vmul.f32 %v177, %v183
    %v202 = vmul.f32 %v178, %v184
    %v203 = vmul.f32 %v179, %v185
    %v204 = vmul.f32 %v180, %v186
    %vm205 = vcmask 1042432
    %v206 = vsel %vm205, %v201, 0.0
    %v207 = vsel %vm205, %v202, 0.0
    %v208 = vadd.f32 %v206, %v207
    %209 = vadd.xlane.f32.xlu0 %v208
    %v210 = vpop.xlane.xlu0 %209
    %v211 = vsel %vm205, %v203, 0.0
    %v212 = vsel %vm205, %v204, 0.0
    %v213 = vadd.f32 %v211, %v212
    %214 = vadd.xlane.f32.xlu0 %v213
    %v215 = vpop.xlane.xlu0 %214
    %v216 = vperm.slane %v195, 0
    %v217 = vperm.slane %v200, 0
    %v218 = vrcp.pop %v216
    %v219 = vmul.f32 %v216, %v218
    %v220 = vsub.f32 1.0, %v219
    %v221 = vmul.f32 %v218, %v220
    %v222 = vadd.f32 %v218, %v221
    %vm223 = vweird.f32 %v216
    %vm224 = vweird.f32 %v218
    %vm225 = vmor %vm223, %vm224
    %v226 = vsel %vm225, %v218, %v222
    %v227 = vand.u32 2147483647, %v216
    %vm228 = vcmp.eq.f32.partialorder %v227, 8.507059e+37
    %v229 = vand.u32 %v216, 2147483648
    %v230 = vor.u32 1.1754944e-38, %v229
    %v231 = vsel %vm228, %v230, %v226
    %v232 = vmul.f32 %v210, %v231
    %v233 = vrcp.pop %v217
    %v234 = vmul.f32 %v217, %v233
    %v235 = vsub.f32 1.0, %v234
    %v236 = vmul.f32 %v233, %v235
    %v237 = vadd.f32 %v233, %v236
    %vm238 = vweird.f32 %v217
    %vm239 = vweird.f32 %v233
    %vm240 = vmor %vm238, %vm239
    %v241 = vsel %vm240, %v233, %v237
    %v242 = vand.u32 2147483647, %v217
    %vm243 = vcmp.eq.f32.partialorder %v242, 8.507059e+37
    %v244 = vand.u32 %v217, 2147483648
    %v245 = vor.u32 1.1754944e-38, %v244
    %v246 = vsel %vm243, %v245, %v241
    %v247 = vmul.f32 %v215, %v246
    %v248 = vsub.f32 %v177, %v232
    %v249 = vsub.f32 %v178, %v232
    %v250 = vsub.f32 %v179, %v247
    %v251 = vsub.f32 %v180, %v247
    %v252 = vmul.f32 %v248, %v183
    %v253 = vmul.f32 %v249, %v184
    %v254 = vmul.f32 %v250, %v185
    %v255 = vmul.f32 %v251, %v186
    %v256 = vmul.f32 %v252, %v252
    %v257 = vmul.f32 %v253, %v253
    %v258 = vmul.f32 %v254, %v254
    %v259 = vmul.f32 %v255, %v255
    %v260 = vsel %vm205, %v256, 0.0
    %v261 = vsel %vm205, %v257, 0.0
    %v262 = vadd.f32 %v260, %v261
    %263 = vadd.xlane.f32.xlu0 %v262
    %v264 = vpop.xlane.xlu0 %263
    %v265 = vsel %vm205, %v258, 0.0
    %v266 = vsel %vm205, %v259, 0.0
    %v267 = vadd.f32 %v265, %v266
    %268 = vadd.xlane.f32.xlu0 %v267
    %v269 = vpop.xlane.xlu0 %268
    %v270 = vsub.f32 %v195, 1.0
    %v271 = vsub.f32 %v200, 1.0
    %v272 = vperm.slane %v270, 0
    %v273 = vperm.slane %v271, 0
    %v274 = vrcp.pop %v272
    %v275 = vmul.f32 %v272, %v274
    %v276 = vsub.f32 1.0, %v275
    %v277 = vmul.f32 %v274, %v276
    %v278 = vadd.f32 %v274, %v277
    %vm279 = vweird.f32 %v272
    %vm280 = vweird.f32 %v274
    %vm281 = vmor %vm279, %vm280
    %v282 = vsel %vm281, %v274, %v278
    %v283 = vand.u32 2147483647, %v272
    %vm284 = vcmp.eq.f32.partialorder %v283, 8.507059e+37
    %v285 = vand.u32 %v272, 2147483648
    %v286 = vor.u32 1.1754944e-38, %v285
    %v287 = vsel %vm284, %v286, %v282
    %v288 = vmul.f32 %v264, %v287
    %v289 = vrcp.pop %v273
    %v290 = vmul.f32 %v273, %v289
    %v291 = vsub.f32 1.0, %v290
    %v292 = vmul.f32 %v289, %v291
    %v293 = vadd.f32 %v289, %v292
    %vm294 = vweird.f32 %v273
    %vm295 = vweird.f32 %v289
    %vm296 = vmor %vm294, %vm295
    %v297 = vsel %vm296, %v289, %v293
    %v298 = vand.u32 2147483647, %v273
    %vm299 = vcmp.eq.f32.partialorder %v298, 8.507059e+37
    %v300 = vand.u32 %v273, 2147483648
    %v301 = vor.u32 1.1754944e-38, %v300
    %v302 = vsel %vm299, %v301, %v297
    %v303 = vmul.f32 %v269, %v302
    %v304 = vrsqrt.pop %v288
    %v305 = vmul.f32 %v304, %v288
    %v306 = vmul.f32 %v305, %v304
    %v307 = vmul.f32 0.5, %v306
    %v308 = vsub.f32 1.5, %v307
    %v309 = vmul.f32 %v304, %v308
    %vm310 = vweird.f32 %v288
    %vm311 = vweird.f32 %v304
    %vm312 = vmor %vm310, %vm311
    %v313 = vsel %vm312, %v304, %v309
    %v314 = vrsqrt.pop %v303
    %v315 = vmul.f32 %v314, %v303
    %v316 = vmul.f32 %v315, %v314
    %v317 = vmul.f32 0.5, %v316
    %v318 = vsub.f32 1.5, %v317
    %v319 = vmul.f32 %v314, %v318
    %vm320 = vweird.f32 %v303
    %vm321 = vweird.f32 %v314
    %vm322 = vmor %vm320, %vm321
    %v323 = vsel %vm322, %v314, %v319
    %v324 = vmul.f32 %v252, %v313
    %v325 = vmul.f32 %v253, %v313
    %v326 = vmul.f32 %v254, %v323
    %v327 = vmul.f32 %v255, %v323
    %v332 = vrot.slane %v325, 4
    %v333 = vrot.slane %v327, 4
    %v334 = vsel %vm60, %v324, %v332
    %v335 = vsel %vm60, %v326, %v333
    %338 = vst [vmem:[%s2] sm:$0x77] %v334
    %339 = vst [vmem:[%s2 + $0x8] sm:$0x77] %v335
    // Predicated region
    $region18: #{tpu_custom_call.1} parent=1 // pred_check
      _
    $region19: #{tpu_custom_call.1} parent=1 // pred_check_branch
      %341 = sbr.rel (0) target = $region21
    $region20: #{tpu_custom_call.1} parent=1 // pred_region
      _
    $region21: #{tpu_custom_call.1} parent=1 // pred_fallthru
      _
    // Predicated region
    $region22: #{tpu_custom_call.1} parent=1 // pred_check
      _
    $region23: #{tpu_custom_call.1} parent=1 // pred_check_branch
      %343 = sbr.rel (0) target = $region25
    $region24: #{tpu_custom_call.1} parent=1 // pred_region
      _
    $region25: #{tpu_custom_call.1} parent=1 // pred_fallthru
      _
    %344 = vsyncpa [#allocation3], 1
    %345 = vsyncpa [#allocation5], 1

</llo_original>
